<compile_context>
chip_gen: v7x
topology: tpu7x:2x2x1
jax: 0.10.0
libtpu: 0.0.40
codegen_flags: <defaults>
</compile_context>

<pallas_src>
import functools

import numpy as np
import jax
import jax.numpy as jnp
from jax.experimental import pallas as pl
from jax.experimental.pallas import tpu as pltpu


# --------------------------------------------------------------------------- #
# Streaming kernel: accumulate per-chunk feature sums.                         #
# --------------------------------------------------------------------------- #
def _center_sum_kernel(feats_ref, psum_ref, *, total_b, chunk, tile_b,
                       tiles_per_split, ragged):
    c = pl.program_id(0)            # core-split axis ("parallel", 2 TCs on v7x)
    t = pl.program_id(1)            # tile axis within this split ("arbitrary")
    n_pad = psum_ref.shape[1]

    @pl.when(t == 0)
    def _init():
        psum_ref[...] = jnp.zeros_like(psum_ref)

    offset = (c * tiles_per_split + t) * tile_b     # global row offset of this tile

    # Native-dtype stream; widen to f32 for accumulation (no-op for f32 inputs).
    x = feats_ref[...].astype(jnp.float32)
    if ragged:
        # Last tile extends past B; its padded rows hold undefined data -> zero them.
        rid = jax.lax.broadcasted_iota(jnp.int32, x.shape, 0) + offset
        x = jnp.where(rid < total_b, x, jnp.float32(0.0))

    # 0/1 chunk-membership weights generated in-kernel: center row r is active for
    # global columns in [r*chunk, (r+1)*chunk); pad rows (r >= n) never match.
    col = jax.lax.broadcasted_iota(jnp.int32, (n_pad, tile_b), 1) + offset
    row = jax.lax.broadcasted_iota(jnp.int32, (n_pad, tile_b), 0)
    lo = row * chunk
    w = jnp.where(jnp.logical_and(col >= lo, col < lo + chunk),
                  jnp.float32(1.0), jnp.float32(0.0))

    psum_ref[...] += jnp.dot(w, x, preferred_element_type=jnp.float32)[None]


# --------------------------------------------------------------------------- #
# Epilogue kernel: combine partial sums, distances, hinge loss, correct count. #
# --------------------------------------------------------------------------- #
def _epilogue_kernel(psum_ref, loss_ref, correct_ref, *, n, label_num, chunk,
                     margin, n_splits):
    acc = psum_ref[0]
    for s in range(1, n_splits):                      # static tiny loop (<= 2)
        acc = acc + psum_ref[s]
    centers = acc / jnp.float32(chunk)                # (n_pad, D) f32
    n_pad = centers.shape[0]

    gram = jax.lax.dot_general(centers, centers, (((1,), (1,)), ((), ())),
                               preferred_element_type=jnp.float32)   # (n_pad, n_pad)

    ri = jax.lax.broadcasted_iota(jnp.int32, (n_pad, n_pad), 0)
    ci = jax.lax.broadcasted_iota(jnp.int32, (n_pad, n_pad), 1)

    # Squared norms from the gram diagonal.
    diag = jnp.where(ri == ci, gram, 0.0)
    sq_col = jnp.sum(diag, axis=1, keepdims=True)     # (n_pad, 1)
    sq_row = jnp.sum(diag, axis=0, keepdims=True)     # (1, n_pad)
    dist = jnp.sqrt(jnp.maximum(sq_col + sq_row - 2.0 * gram, 1e-12))

    # Same-label mask: chunk i has label (i mod label_num); indices < 2*label_num.
    ri_m = ri - label_num * (ri >= label_num).astype(jnp.int32)
    ci_m = ci - label_num * (ci >= label_num).astype(jnp.int32)
    same = ri_m == ci_m
    valid_col = ci < n

    dist_ap = jnp.max(jnp.where(same & valid_col, dist, -jnp.inf),
                      axis=1, keepdims=True)                       # (n_pad, 1)
    dist_an = jnp.min(jnp.where(jnp.logical_and(~same, valid_col), dist, jnp.inf),
                      axis=1, keepdims=True)                       # (n_pad, 1)

    valid_row = jax.lax.broadcasted_iota(jnp.int32, (n_pad, 1), 0) < n
    hinge = jnp.maximum(dist_ap - dist_an + jnp.float32(margin), 0.0)
    hinge = jnp.where(valid_row, hinge, 0.0)

    loss_ref[...] = jnp.sum(hinge, keepdims=True) / jnp.float32(n)           # (1, 1)
    correct_ref[...] = jnp.sum((valid_row & (dist_an >= dist_ap)).astype(jnp.int32),
                               keepdims=True)                                # (1, 1)


# --------------------------------------------------------------------------- #
# Host-side tiling / wrapper.                                                  #
# --------------------------------------------------------------------------- #
def _choose_tiling(B, D, itemsize, target_bytes):
    """Pick (tile_b, num_tiles, n_splits): tile sized purely by bytes; tile count
    nudged even so the batch reduction can split across both v7x TensorCores."""
    row_bytes = max(1, D * itemsize)
    rows = max(8, ((target_bytes // row_bytes) // 8) * 8)
    if rows >= B:
        return B, 1, 1                      # whole batch fits in one ~target-size tile
    tile_b = rows
    num_tiles = (B + tile_b - 1) // tile_b
    if num_tiles % 2 != 0:
        for cand in range(tile_b - 8, max(8, tile_b // 2) - 1, -8):
            nt = (B + cand - 1) // cand
            if nt % 2 == 0:
                tile_b, num_tiles = cand, nt
                break
    n_splits = 2 if (num_tiles >= 2 and num_tiles % 2 == 0) else 1
    return tile_b, num_tiles, n_splits


def center_triplet_loss(feats, labels, margin=0.3, tile_b=None):
    """feats: (B, D) array; labels: host int array (B,). Returns (loss, correct)."""
    feats = jnp.asarray(feats)
    B, D = feats.shape

    # TODO(synk): labels.unique() has a data-dependent size; resolved host-side.
    # As in the PyTorch module, the batch must be ordered as 2*num_classes equal
    # contiguous chunks whose labels follow [label_uni, label_uni].
    labels_np = np.asarray(labels)
    label_uni = np.unique(labels_np)
    label_num = int(label_uni.shape[0])
    assert label_num >= 2, "need >= 2 distinct labels"
    n = 2 * label_num
    assert B % n == 0, "batch must split into 2*num_classes equal contiguous chunks"
    chunk = B // n
    n_pad = ((n + 7) // 8) * 8

    itemsize = jnp.dtype(feats.dtype).itemsize

    # Generation-aware budget: v7x has 64 MiB VMEM, v5e/v6e have 128 MiB.
    try:
        vmem_cap = int(getattr(pltpu.get_tpu_info(), "vmem_capacity_bytes", 128 << 20))
    except Exception:
        vmem_cap = 128 << 20
    target_bytes = (4 << 20) if vmem_cap <= (64 << 20) else (8 << 20)

    if tile_b is None:
        tile_b, num_tiles, n_splits = _choose_tiling(B, D, itemsize, target_bytes)
    else:
        tile_b = int(tile_b)
        if tile_b >= B:
            tile_b, num_tiles = B, 1
        else:
            assert tile_b % 8 == 0, "tile_b must be a multiple of 8"
            num_tiles = (B + tile_b - 1) // tile_b
        n_splits = 2 if (num_tiles >= 2 and num_tiles % 2 == 0) else 1
    tiles_per_split = num_tiles // n_splits
    ragged = (num_tiles * tile_b != B)

    tile_bytes = tile_b * D * itemsize
    vmem_need = 2 * tile_bytes + 2 * (n_pad * D * 4) + (2 << 20)
    vmem_limit = int(min(max(vmem_need, 16 << 20), (7 * vmem_cap) // 8))

    stream_kernel = functools.partial(
        _center_sum_kernel, total_b=B, chunk=chunk, tile_b=tile_b,
        tiles_per_split=tiles_per_split, ragged=ragged)

    cost = pl.CostEstimate(
        flops=2 * n_pad * B * D,
        transcendentals=0,
        bytes_accessed=B * D * itemsize + n_splits * n_pad * D * 4)

    # Pass 1: HBM-bandwidth-bound streaming reduction of feats into per-chunk sums.
    psum = pl.pallas_call(
        stream_kernel,
        out_shape=jax.ShapeDtypeStruct((n_splits, n_pad, D), jnp.float32),
        grid_spec=pltpu.PrefetchScalarGridSpec(
            num_scalar_prefetch=0,
            grid=(n_splits, tiles_per_split),
            in_specs=[pl.BlockSpec((tile_b, D),
                                   lambda c, t: (c * tiles_per_split + t, 0))],
            out_specs=pl.BlockSpec((1, n_pad, D), lambda c, t: (c, 0, 0))),
        compiler_params=pltpu.CompilerParams(
            dimension_semantics=("parallel", "arbitrary"),
            vmem_limit_bytes=vmem_limit),
        cost_estimate=cost,
    )(feats)

    # Pass 2: tiny (n x n) epilogue — combine partials, distances, hinge, correct.
    epi_kernel = functools.partial(
        _epilogue_kernel, n=n, label_num=label_num, chunk=chunk,
        margin=float(margin), n_splits=n_splits)

    loss, correct = pl.pallas_call(
        epi_kernel,
        out_shape=(jax.ShapeDtypeStruct((1, 1), jnp.float32),
                   jax.ShapeDtypeStruct((1, 1), jnp.int32)),
    )(psum)

    return loss[0, 0], correct[0, 0]


# --------------------------------------------------------------------------- #
# Pure-numpy reference (float64) matching the PyTorch module.                  #
# --------------------------------------------------------------------------- #
def _reference(feats_np, labels_np, margin=0.3):
    feats = np.asarray(feats_np, dtype=np.float64)
    label_uni = np.unique(np.asarray(labels_np))
    n = 2 * len(label_uni)
    chunk = feats.shape[0] // n
    centers = feats.reshape(n, chunk, -1).mean(axis=1)
    sq = (centers ** 2).sum(1, keepdims=True)
    dist = np.sqrt(np.clip(sq + sq.T - 2.0 * centers @ centers.T, 1e-12, None))
    targets = np.concatenate([label_uni, label_uni])
    mask = targets[:, None] == targets[None, :]
    ap = np.array([dist[i][mask[i]].max() for i in range(n)])
    an = np.array([dist[i][~mask[i]].min() for i in range(n)])
    loss = np.maximum(ap - an + margin, 0.0).mean()
    correct = int((an >= ap).sum())
    return loss, correct


if __name__ == "__main__":
    # Case 1: tiny single-tile path (grid (1,1)). 2 ids x 2 modalities x 2 per chunk.
    B, D = 8, 32
    labels = np.array([0, 0, 1, 1, 0, 0, 1, 1], dtype=np.int32)
    feats = jax.random.normal(jax.random.PRNGKey(0), (B, D), dtype=jnp.float32)
    loss, correct = jax.block_until_ready(center_triplet_loss(feats, labels, margin=0.3))
    ref_l, ref_c = _reference(np.asarray(feats), labels, margin=0.3)
    assert abs(float(loss) - ref_l) <= 1e-4 + 1e-3 * abs(ref_l), (float(loss), ref_l)
    assert int(correct) == ref_c, (int(correct), ref_c)

    # Case 2: multi-tile + 2-way core split (grid (2,3)); tiles cross chunk boundaries.
    ids2, chunk2, D2 = 4, 6, 128
    B2 = 2 * ids2 * chunk2                               # 48
    labels2 = np.repeat(np.concatenate([np.arange(ids2), np.arange(ids2)]),
                        chunk2).astype(np.int32)
    feats2 = jax.random.normal(jax.random.PRNGKey(1), (B2, D2), dtype=jnp.float32)
    loss2, correct2 = jax.block_until_ready(
        center_triplet_loss(feats2, labels2, margin=0.3, tile_b=8))
    ref2_l, ref2_c = _reference(np.asarray(feats2), labels2, margin=0.3)
    assert abs(float(loss2) - ref2_l) <= 1e-4 + 1e-3 * abs(ref2_l), (float(loss2), ref2_l)
    assert int(correct2) == ref2_c, (int(correct2), ref2_c)

    # Case 3: ragged last tile (B=40 not divisible by tile_b=16) — masked in-kernel.
    ids3, chunk3, D3 = 4, 5, 128
    B3 = 2 * ids3 * chunk3                               # 40
    labels3 = np.repeat(np.concatenate([np.arange(ids3), np.arange(ids3)]),
                        chunk3).astype(np.int32)
    feats3 = jax.random.normal(jax.random.PRNGKey(2), (B3, D3), dtype=jnp.float32)
    loss3, correct3 = jax.block_until_ready(
        center_triplet_loss(feats3, labels3, margin=0.3, tile_b=16))
    ref3_l, ref3_c = _reference(np.asarray(feats3), labels3, margin=0.3)
    assert abs(float(loss3) - ref3_l) <= 1e-4 + 1e-3 * abs(ref3_l), (float(loss3), ref3_l)
    assert int(correct3) == ref3_c, (int(correct3), ref3_c)

    print("KERNEL_OK")
</pallas_src>

<mosaic_0001>
module attributes {stable_mosaic.version = 11 : i64} {
  func.func @_center_sum_kernel(%arg0: i32, %arg1: i32, %arg2: memref<8x32xf32, #tpu.memory_space<vmem>>, %arg3: memref<1x8x32xf32, #tpu.memory_space<vmem>>) attributes {dimension_semantics = [#tpu.dimension_semantics<parallel>, #tpu.dimension_semantics<arbitrary>], iteration_bounds = array<i64: 1, 1>, scalar_prefetch = 0 : i64, scratch_operands = 0 : i64, tpu.core_type = #tpu.core_type<tc>, window_params = [{transform_indices = @transform_0, window_bounds = array<i64: 8, 32>}, {transform_indices = @transform_1, window_bounds = array<i64: 1, 8, 32>}]} {
    %c0_i32 = arith.constant 0 : i32
    %0 = arith.cmpi eq, %arg1, %c0_i32 : i32
    %1 = arith.extui %0 : i1 to i32
    %c0_i32_0 = arith.constant 0 : i32
    %2 = arith.cmpi ne, %1, %c0_i32_0 : i32
    scf.if %2 {
      %cst_11 = arith.constant 0.000000e+00 : f32
      %26 = vector.broadcast %cst_11 : f32 to vector<1x8x32xf32>
      %c0_12 = arith.constant 0 : index
      %c0_13 = arith.constant 0 : index
      %c0_14 = arith.constant 0 : index
      %27 = vector.load %arg3[%c0_12, %c0_13, %c0_14] : memref<1x8x32xf32, #tpu.memory_space<vmem>>, vector<1x8x32xf32>
      tpu.vector_store %arg3[%c0_12, %c0_13, %c0_14], %26 {strides = array<i32>} : memref<1x8x32xf32, #tpu.memory_space<vmem>>, vector<1x8x32xf32>,
    } else {
    }
    %c1_i32 = arith.constant 1 : i32
    %3 = arith.muli %arg0, %c1_i32 : i32
    %4 = arith.addi %3, %arg1 : i32
    %c8_i32 = arith.constant 8 : i32
    %5 = arith.muli %4, %c8_i32 : i32
    %c0 = arith.constant 0 : index
    %c0_1 = arith.constant 0 : index
    %6 = vector.load %arg2[%c0, %c0_1] : memref<8x32xf32, #tpu.memory_space<vmem>>, vector<8x32xf32>
    %7 = tpu.iota {dimensions = array<i32: 1>} : vector<8x8xi32>
    %8 = vector.broadcast %5 : i32 to vector<8x8xi32>
    %9 = arith.addi %7, %8 : vector<8x8xi32>
    %10 = tpu.iota {dimensions = array<i32: 0>} : vector<8x8xi32>
    %c2_i32 = arith.constant 2 : i32
    %11 = vector.broadcast %c2_i32 : i32 to vector<8x8xi32>
    %12 = arith.muli %10, %11 : vector<8x8xi32>
    %13 = arith.cmpi sge, %9, %12 : vector<8x8xi32>
    %c2_i32_2 = arith.constant 2 : i32
    %14 = vector.broadcast %c2_i32_2 : i32 to vector<8x8xi32>
    %15 = arith.addi %12, %14 : vector<8x8xi32>
    %16 = arith.cmpi slt, %9, %15 : vector<8x8xi32>
    %17 = arith.andi %13, %16 : vector<8x8xi1>
    %cst = arith.constant 1.000000e+00 : f32
    %cst_3 = arith.constant 0.000000e+00 : f32
    %18 = vector.broadcast %cst : f32 to vector<8x8xf32>
    %19 = vector.broadcast %cst_3 : f32 to vector<8x8xf32>
    %20 = arith.select %17, %18, %19 : vector<8x8xi1>, vector<8x8xf32>
    %c0_4 = arith.constant 0 : index
    %c0_5 = arith.constant 0 : index
    %c0_6 = arith.constant 0 : index
    %21 = vector.load %arg3[%c0_4, %c0_5, %c0_6] : memref<1x8x32xf32, #tpu.memory_space<vmem>>, vector<1x8x32xf32>
    %cst_7 = arith.constant dense<0.000000e+00> : vector<8x32xf32>
    %22 = tpu.matmul %20, %6, %cst_7 {dimension_numbers = #tpu.dot_dimension_numbers<[1], [0], [0], [1], [0, 0, 1, 1], [], []>} : vector<8x8xf32>, vector<8x32xf32>, vector<8x32xf32> -> vector<8x32xf32>
    %23 = vector.shape_cast %22 : vector<8x32xf32> to vector<1x8x32xf32>
    %24 = arith.addf %21, %23 : vector<1x8x32xf32>
    %c0_8 = arith.constant 0 : index
    %c0_9 = arith.constant 0 : index
    %c0_10 = arith.constant 0 : index
    %25 = vector.load %arg3[%c0_8, %c0_9, %c0_10] : memref<1x8x32xf32, #tpu.memory_space<vmem>>, vector<1x8x32xf32>
    tpu.vector_store %arg3[%c0_8, %c0_9, %c0_10], %24 {strides = array<i32>} : memref<1x8x32xf32, #tpu.memory_space<vmem>>, vector<1x8x32xf32>,
    return
  }
  func.func @transform_0(%arg0: i32, %arg1: i32) -> (i32, i32) {
    %c1_i32 = arith.constant 1 : i32
    %0 = arith.muli %arg0, %c1_i32 : i32
    %1 = arith.addi %0, %arg1 : i32
    %c0_i32 = arith.constant 0 : i32
    %c0_i32_0 = arith.constant 0 : i32
    return %1, %c0_i32 : i32, i32
  }
  func.func @transform_1(%arg0: i32, %arg1: i32) -> (i32, i32, i32) {
    %c0_i32 = arith.constant 0 : i32
    %c0_i32_0 = arith.constant 0 : i32
    %c0_i32_1 = arith.constant 0 : i32
    return %arg0, %c0_i32, %c0_i32_0 : i32, i32, i32
  }
}

</mosaic_0001>

<llo_original>
// kernel: tpu_custom_call.1
$region0: #{tpu_custom_call.1}
  #allocation0 [shape = 'u32[]', space=smem, size = 0x4, offset = 0x4, fixed_abs, tag = 'smem constant byte address 0x4 - core index']
  #allocation1 [shape = 'u32[144,128]{1,0:T(1,128)}', space=vmem, size = 0x12000, scoped, tag = 'internal scratch']
  %s0 = inlined_call_operand.hbm [shape: f32[8,32], index: 0, kind: input, shape index: {}]
  %s1 = inlined_call_operand.hbm [shape: f32[1,8,32], index: 1, kind: output, shape index: {}]
  %s2 = sld [smem:[#allocation0]]
  $region22: #{tpu_custom_call.1} parent=0
    _
  %s4 = ssub.s32 1, %s2
  %s5 = scalar_select 0, %s4, %s2
  $region1: #{tpu_custom_call.1} parent=0
    #allocation2 [shape = 'u8[4096]{0}', space=vmem, size = 0x1000, scoped, tag = 'input window, operand 0, single buffered']
    #allocation3 [shape = 's32[1]{0}', space=sflag, size = 0x4, scoped, tag = 'scoped memory for tpu_custom_call.1']
    #allocation4 [shape = 's32[1]{0}', space=sflag, size = 0x4, scoped, tag = 'scoped memory for tpu_custom_call.1']
    #allocation5 [shape = 'u8[4096]{0}', space=vmem, size = 0x1000, scoped, tag = 'output window, operand 0, single buffered']
    %6 = vsyncpa [#allocation3], 0
    %7 = vsyncpa [#allocation4], 0
    // Predicated region
    $region2: #{tpu_custom_call.1} parent=1 // pred_check
      _
    $region3: #{tpu_custom_call.1} parent=1 // pred_check_branch
      %9 = sbr.rel (0) target = $region5
    $region4: #{tpu_custom_call.1} parent=1 // pred_region
      %s10 = sadd.s32 0, 0
      %s12 = ssub.s32 128, 128
      %13 = vsyncadd [#allocation3], %s12
      %s14 = smul.addr %s10, 128
      %s15 = scalar_lea.hbm %s0, %s14
      %s17 = sshll.u32 [#allocation2], 4
      %s18 = int_to_ptr.vmem [resolvable:$true] %s17
      %20 = dma.hbm_to_vmem [thread:$0]  %s15, 128, %s18, [#allocation3]
    $region5: #{tpu_custom_call.1} parent=1 // pred_fallthru
      _
    // Predicated region
    $region6: #{tpu_custom_call.1} parent=1 // pred_check
      _
    $region7: #{tpu_custom_call.1} parent=1 // pred_check_branch
      %22 = sbr.rel (0) target = $region9
    $region8: #{tpu_custom_call.1} parent=1 // pred_region
      %23 = dma.done [#allocation3], 128
    $region9: #{tpu_custom_call.1} parent=1 // pred_fallthru
      _
    %s24 = sadd.s32 0, 0
    %p25 = scmp.eq.s32.totalorder 0, 0
    // Predicated region
    $region10: #{tpu_custom_call.1} parent=1 // pred_check
      %p26 = pneg %p25
    $region11: #{tpu_custom_call.1} parent=1 // pred_check_branch
      %28 = sbr.rel (%p26) target = $region13
    $region12: #{tpu_custom_call.1} parent=1 // pred_region
      %vm29 = vcmask 261120
      %30 = vst.msk [vmem:[#allocation5] sm:$0xff] %vm29, 0.0
    $region13: #{tpu_custom_call.1} parent=1 // pred_fallthru
      _
    %s31 = sadd.s32 0, 0
    %s32 = smul.u32 %s31, 8
    %v33 = vld [vmem:[#allocation2] sm:$0xff]
    %v34 = vlaneseq
    %v35 = vand.u32 %v34, 127
    %v36 = vstv %s32
    %v37 = vadd.s32 %v35, %v36
    %v38 = vlaneseq
    %v39 = vshrl.u32 %v38, 7
    %v40 = vmul.u32 %v39, 2
    %vm41 = vcmp.ge.s32.totalorder %v37, %v40
    %v42 = vadd.s32 %v40, 2
    %vm43 = vcmp.lt.s32.totalorder %v37, %v42
    %vm44 = vmand %vm41, %vm43
    %v45 = vsel %vm44, 1.0, 0.0
    %v46 = vld [vmem:[#allocation5] sm:$0xff]
    %vm47 = vcmask 64512
    %v49 = vsel %vm47, %v45, 0
    %51 = vmatprep.subr.mxu0 0.0
    %52 = vmatpush1.msra.mxu0 %v33
    %53 = vmatprep.subr.mxu0 0.0
    %54 = vmatpush1.msra.mxu0 0.0
    %55 = vmatprep.subr.mxu0 0.0
    %56 = vmatpush1.msra.mxu0 0.0
    %57 = vmatprep.subr.mxu0 0.0
    %58 = vmatpush1.msra.mxu0 0.0
    %59 = vmatprep.subr.mxu0 0.0
    %60 = vmatpush1.msra.mxu0 0.0
    %61 = vmatprep.subr.mxu0 0.0
    %62 = vmatpush1.msra.mxu0 0.0
    %63 = vmatprep.subr.mxu0 0.0
    %64 = vmatpush1.msra.mxu0 0.0
    %65 = vmatprep.subr.mxu0 0.0
    %66 = vmatpush1.msra.mxu0 0.0
    %67 = vmatprep.subr.mxu0 0.0
    %68 = vmatpush1.msra.mxu0 0.0
    %69 = vmatprep.subr.mxu0 0.0
    %70 = vmatpush1.msra.mxu0 0.0
    %71 = vmatprep.subr.mxu0 0.0
    %72 = vmatpush1.msra.mxu0 0.0
    %73 = vmatprep.subr.mxu0 0.0
    %74 = vmatpush1.msra.mxu0 0.0
    %75 = vmatprep.subr.mxu0 0.0
    %76 = vmatpush1.msra.mxu0 0.0
    %77 = vmatprep.subr.mxu0 0.0
    %78 = vmatpush1.msra.mxu0 0.0
    %79 = vmatprep.subr.mxu0 0.0
    %80 = vmatpush1.msra.mxu0 0.0
    %81 = vmatprep.subr.mxu0 0.0
    %82 = vmatpush1.msra.mxu0 0.0
    %83 = vmatprep.subr.mxu0 0.0
    %84 = vmatpush1.msra.mxu0 0.0
    %85 = vmatprep.subr.mxu0 0.0
    %86 = vmatpush1.msra.mxu0 0.0
    %87 = vmatprep.subr.mxu0 0.0
    %88 = vmatpush1.msra.mxu0 0.0
    %89 = vmatprep.subr.mxu0 0.0
    %90 = vmatpush1.msra.mxu0 0.0
    %91 = vmatprep.subr.mxu0 0.0
    %92 = vmatpush1.msra.mxu0 0.0
    %93 = vmatprep.subr.mxu0 0.0
    %94 = vmatpush1.msra.mxu0 0.0
    %95 = vmatprep.subr.mxu0 0.0
    %96 = vmatpush1.msra.mxu0 0.0
    %97 = vmatprep.subr.mxu0 0.0
    %98 = vmatpush1.msra.mxu0 0.0
    %99 = vmatprep.subr.mxu0 0.0
    %100 = vmatpush1.msra.mxu0 0.0
    %101 = vmatprep.subr.mxu0 0.0
    %102 = vmatpush1.msra.mxu0 0.0
    %103 = vmatprep.subr.mxu0 0.0
    %104 = vmatpush1.msra.mxu0 0.0
    %105 = vmatprep.subr.mxu0 0.0
    %106 = vmatpush1.msra.mxu0 0.0
    %107 = vmatprep.subr.mxu0 0.0
    %108 = vmatpush1.msra.mxu0 0.0
    %109 = vmatprep.subr.mxu0 0.0
    %110 = vmatpush1.msra.mxu0 0.0
    %111 = vmatprep.subr.mxu0 0.0
    %112 = vmatpush1.msra.mxu0 0.0
    %113 = vmatprep.subr.mxu0 0.0
    %114 = vmatpush1.msra.mxu0 0.0
    %115 = vmatprep.mubr.f32.mxu0 0.0
    %116 = vmatmul.mubr.f32.gmra.mrb[0].mxu0 %v49
    %v117 = vpop.f32.mrb[0].mxu0
    %v118 = vadd.f32 0.0, %v117
    %v119 = vpop.f32.mrb[0].mxu0
    %120 = vdwg.mxu0
    %v121 = vadd.f32 %v46, %v118
    %vm122 = vcmask 261120
    %123 = vst.msk [vmem:[#allocation5] sm:$0xff] %vm122, %v121
    // Predicated region
    $region14: #{tpu_custom_call.1} parent=1 // pred_check
      _
    $region15: #{tpu_custom_call.1} parent=1 // pred_check_branch
      %125 = sbr.rel (0) target = $region17
    $region16: #{tpu_custom_call.1} parent=1 // pred_region
      %s127 = ssub.s32 128, 128
      %128 = vsyncadd [#allocation4], %s127
      %s130 = sshll.u32 [#allocation5], 4
      %s131 = int_to_ptr.vmem [resolvable:$true] %s130
      %133 = dma.vmem_to_hbm [thread:$0]  %s131, 128, %s1, [#allocation4]
    $region17: #{tpu_custom_call.1} parent=1 // pred_fallthru
      _
    // Predicated region
    $region18: #{tpu_custom_call.1} parent=1 // pred_check
      _
    $region19: #{tpu_custom_call.1} parent=1 // pred_check_branch
      %135 = sbr.rel (0) target = $region21
    $region20: #{tpu_custom_call.1} parent=1 // pred_region
      %136 = dma.done [#allocation4], 128
    $region21: #{tpu_custom_call.1} parent=1 // pred_fallthru
      _
    %137 = vsyncpa [#allocation3], 1
    %138 = vsyncpa [#allocation4], 1

</llo_original>
